<compile_context>
chip_gen: v5e
topology: v5e:2x2
jax: 0.10.0
libtpu: 0.0.40
codegen_flags: <defaults>
</compile_context>

<pallas_src>
import functools

import jax
import jax.numpy as jnp
from jax.experimental import pallas as pl
from jax.experimental.pallas import tpu as pltpu

_IN_FEATURES = 5

# ---- packed-parameter slab layout (f32, [128, 128]) --------------------------
# Weight blocks start on 8-row sublane boundaries; w4 is stored transposed as a
# [10, 1] column so the last layer can be done on the VPU without reshapes.
_W1_R, _W2_R, _W3_R = 0, 16, 40          # weights [out, in] in cols 0:in
_W4T_R = 56                              # w4^T as [10, 1] column in col 0
_B1_R, _B2_R, _B3_R = 72, 88, 112        # biases [out] in col 0
_B4_R = 122                              # scalar bias b4 at (122, 0)
_SLAB_ROWS, _SLAB_COLS = 128, 128


def _mlp_kernel(slab_ref, xt_ref, o_ref):
    """One batch tile of the 4-layer MLP with the batch on the lane axis.

    slab_ref: [128, 128] packed weights/biases (f32), resident across the grid.
    xt_ref:   [5, TILE_B]  (features x batch).
    o_ref:    [1, TILE_B]  (lane-dense output tile).
    """
    x = xt_ref[...]                                     # f32 [5, TILE_B]

    w1 = slab_ref[_W1_R:_W1_R + 10, 0:5]
    w2 = slab_ref[_W2_R:_W2_R + 20, 0:10]
    w3 = slab_ref[_W3_R:_W3_R + 10, 0:20]
    w4t = slab_ref[_W4T_R:_W4T_R + 10, 0:1]             # [10, 1]
    b1 = slab_ref[_B1_R:_B1_R + 10, 0:1]
    b2 = slab_ref[_B2_R:_B2_R + 20, 0:1]
    b3 = slab_ref[_B3_R:_B3_R + 10, 0:1]
    b4 = slab_ref[_B4_R:_B4_R + 1, 0:1]                 # [1, 1]

    # MXU default precision; pass precision=HIGHEST for exact fp32 parity if
    # ever required (1e-5 tolerance passes with the default, at ~3x less cost).
    h = jnp.maximum(jnp.dot(w1, x, preferred_element_type=jnp.float32) + b1, 0.0)
    h = jnp.maximum(jnp.dot(w2, h, preferred_element_type=jnp.float32) + b2, 0.0)
    h = jnp.maximum(jnp.dot(w3, h, preferred_element_type=jnp.float32) + b3, 0.0)

    # Final [1,10]@[10,TILE_B] on the VPU/XLU (broadcast-mul + sublane sum)
    # instead of a 4th dependent single-row MXU matmul at the step tail.
    y = jnp.sum(w4t * h, axis=0, keepdims=True) + b4    # [1, TILE_B]
    o_ref[...] = y.astype(o_ref.dtype)


def _round_up(n, m):
    return ((n + m - 1) // m) * m


def _forward_feature_major(xt, slab, tile_b):
    """Core path: xt is feature-major [5, B]; returns feature-major [1, B]."""
    nfeat, B = xt.shape
    assert nfeat == _IN_FEATURES, xt.shape
    xt = xt.astype(jnp.float32)                         # mirrors x.float()
    slab = slab.astype(jnp.float32)

    # Lane-dense tile; round any caller-provided tile_b up to a 128 multiple.
    tile_b = max(128, _round_up(int(tile_b), 128))

    # Pad only to the 128-lane tile (NOT to tile_b); trailing block is partial.
    b_pad = _round_up(B, 128)
    if b_pad != B:
        xt = jnp.pad(xt, ((0, 0), (0, b_pad - B)))

    tile = min(tile_b, b_pad)
    # v7x megacore: keep >= 2 "parallel" grid steps for mid-sized batches so
    # both TensorCores get work; large batches already have many steps.
    if b_pad >= 256:
        tile = min(tile, _round_up(b_pad // 2, 128))
    grid = (pl.cdiv(b_pad, tile),)

    cost = pl.CostEstimate(
        flops=2 * b_pad * (5 * 10 + 10 * 20 + 20 * 10 + 10 * 1),
        transcendentals=0,
        bytes_accessed=(_IN_FEATURES * b_pad + b_pad + _SLAB_ROWS * _SLAB_COLS) * 4,
    )

    out_t = pl.pallas_call(
        _mlp_kernel,
        grid=grid,
        in_specs=[
            # Parameter slab: constant block index -> DMA'd once, resident.
            pl.BlockSpec((_SLAB_ROWS, _SLAB_COLS), lambda i: (0, 0)),
            # Input tile: batch on lanes, double-buffered across grid steps.
            pl.BlockSpec((_IN_FEATURES, tile), lambda i: (0, i)),
        ],
        out_specs=pl.BlockSpec((1, tile), lambda i: (0, i)),
        out_shape=jax.ShapeDtypeStruct((1, b_pad), jnp.float32),
        compiler_params=pltpu.CompilerParams(
            dimension_semantics=("parallel",)),
        cost_estimate=cost,
    )(slab, xt)

    return out_t[:, :B]                                 # [1, B]


@functools.partial(jax.jit, static_argnames=("tile_b",))
def mlp_forward_t(xt, slab, *, tile_b=8192):
    """Fast path: xt already feature-major [5, B] (no wrapper transpose).

    Returns feature-major logits [1, B] (float32).
    Sweep tile_b in 4096..16384 per generation; 16K-32K is fine on v7x.
    """
    return _forward_feature_major(xt, slab, tile_b)


@functools.partial(jax.jit, static_argnames=("tile_b",))
def mlp_forward(x, slab, *, tile_b=8192):
    """PyTorch-shaped API: x is [B, 5]; returns [B, 1] float32 logits.

    Note: this path transposes x (an extra HBM round trip); prefer generating
    collocation points feature-major and calling mlp_forward_t directly.
    """
    xt = x.astype(jnp.float32).T                        # [5, B]
    return _forward_feature_major(xt, slab, tile_b).T   # [B, 1]


def init_params(key):
    """Deterministic init matching nn.Linear shapes; weights stored [out, in]."""
    sizes = [(5, 10), (10, 20), (20, 10), (10, 1)]
    params = {}
    for i, (fan_in, fan_out) in enumerate(sizes, start=1):
        key, wk, bk = jax.random.split(key, 3)
        bound = 1.0 / jnp.sqrt(jnp.float32(fan_in))
        params[f"w{i}"] = jax.random.uniform(
            wk, (fan_out, fan_in), jnp.float32, -bound, bound)
        params[f"b{i}"] = jax.random.uniform(
            bk, (fan_out,), jnp.float32, -bound, bound)
    return params


def pack_params(params):
    """Pack all weights/biases into one lane-padded f32 slab (one DMA)."""
    slab = jnp.zeros((_SLAB_ROWS, _SLAB_COLS), jnp.float32)
    slab = slab.at[_W1_R:_W1_R + 10, 0:5].set(params["w1"])
    slab = slab.at[_W2_R:_W2_R + 20, 0:10].set(params["w2"])
    slab = slab.at[_W3_R:_W3_R + 10, 0:20].set(params["w3"])
    slab = slab.at[_W4T_R:_W4T_R + 10, 0:1].set(params["w4"].T)   # [10, 1]
    slab = slab.at[_B1_R:_B1_R + 10, 0].set(params["b1"])
    slab = slab.at[_B2_R:_B2_R + 20, 0].set(params["b2"])
    slab = slab.at[_B3_R:_B3_R + 10, 0].set(params["b3"])
    slab = slab.at[_B4_R:_B4_R + 1, 0].set(params["b4"])
    return slab


def mlp_reference(x, params):
    """Pure-JAX reference (PyTorch semantics: y = x @ W.T + b)."""
    h = x.astype(jnp.float32)
    h = jnp.maximum(h @ params["w1"].T + params["b1"], 0.0)
    h = jnp.maximum(h @ params["w2"].T + params["b2"], 0.0)
    h = jnp.maximum(h @ params["w3"].T + params["b3"], 0.0)
    return h @ params["w4"].T + params["b4"]


if __name__ == "__main__":
    key = jax.random.PRNGKey(0)
    pkey, k1, k2, k3 = jax.random.split(key, 4)
    params = init_params(pkey)
    slab = pack_params(params)

    # 1) Small batch via the PyTorch-shaped entry point ([B, 5] -> [B, 1]).
    B = 8
    x = jax.random.normal(k1, (B, 5), jnp.float32)
    out = jax.block_until_ready(mlp_forward(x, slab))
    ref = mlp_reference(x, params)
    assert out.shape == (B, 1), out.shape
    assert jnp.allclose(out, ref, atol=1e-5, rtol=1e-5), "mismatch (B=8)"

    # 2) Feature-major fast path (no wrapper transpose); B=300 -> b_pad=384,
    #    tile capped to 256 -> 2 "parallel" grid steps with a partial last block.
    B2 = 300
    xt2 = jax.random.normal(k2, (5, B2), jnp.float32)
    out2 = jax.block_until_ready(mlp_forward_t(xt2, slab))
    ref2 = mlp_reference(xt2.T, params)
    assert out2.shape == (1, B2), out2.shape
    assert jnp.allclose(out2.T, ref2, atol=1e-5, rtol=1e-5), "mismatch (B=300, fm)"

    # 3) Explicit small, non-128-multiple tile_b (rounded up to 128) with two
    #    grid steps and padding slice-off.
    B3 = 200
    x3 = jax.random.normal(k3, (B3, 5), jnp.float32)
    out3 = jax.block_until_ready(mlp_forward(x3, slab, tile_b=100))
    ref3 = mlp_reference(x3, params)
    assert out3.shape == (B3, 1), out3.shape
    assert jnp.allclose(out3, ref3, atol=1e-5, rtol=1e-5), "mismatch (B=200)"

    print("KERNEL_OK")
</pallas_src>

<mosaic_0001>
module attributes {stable_mosaic.version = 11 : i64} {
  func.func @_mlp_kernel(%arg0: i32, %arg1: memref<128x128xf32, #tpu.memory_space<vmem>>, %arg2: memref<5x128xf32, #tpu.memory_space<vmem>>, %arg3: memref<1x128xf32, #tpu.memory_space<vmem>>) attributes {dimension_semantics = [#tpu.dimension_semantics<parallel>], iteration_bounds = array<i64: 1>, scalar_prefetch = 0 : i64, scratch_operands = 0 : i64, tpu.core_type = #tpu.core_type<tc>, window_params = [{pipeline_mode = #tpu.pipeline_mode<synchronous>, transform_indices = @transform_0, window_bounds = array<i64: 128, 128>}, {transform_indices = @transform_1, window_bounds = array<i64: 5, 128>}, {transform_indices = @transform_2, window_bounds = array<i64: 1, 128>}]} {
    %c0 = arith.constant 0 : index
    %c0_0 = arith.constant 0 : index
    %0 = vector.load %arg2[%c0, %c0_0] : memref<5x128xf32, #tpu.memory_space<vmem>>, vector<5x128xf32>
    %c0_1 = arith.constant 0 : index
    %c0_2 = arith.constant 0 : index
    %1 = vector.load %arg1[%c0_1, %c0_2] : memref<128x128xf32, #tpu.memory_space<vmem>>, vector<10x5xf32>
    %c16 = arith.constant 16 : index
    %c0_3 = arith.constant 0 : index
    %2 = vector.load %arg1[%c16, %c0_3] : memref<128x128xf32, #tpu.memory_space<vmem>>, vector<20x10xf32>
    %c40 = arith.constant 40 : index
    %c0_4 = arith.constant 0 : index
    %3 = vector.load %arg1[%c40, %c0_4] : memref<128x128xf32, #tpu.memory_space<vmem>>, vector<10x20xf32>
    %c56 = arith.constant 56 : index
    %c0_5 = arith.constant 0 : index
    %4 = vector.load %arg1[%c56, %c0_5] : memref<128x128xf32, #tpu.memory_space<vmem>>, vector<10x1xf32>
    %c72 = arith.constant 72 : index
    %c0_6 = arith.constant 0 : index
    %5 = vector.load %arg1[%c72, %c0_6] : memref<128x128xf32, #tpu.memory_space<vmem>>, vector<10x1xf32>
    %c88 = arith.constant 88 : index
    %c0_7 = arith.constant 0 : index
    %6 = vector.load %arg1[%c88, %c0_7] : memref<128x128xf32, #tpu.memory_space<vmem>>, vector<20x1xf32>
    %c112 = arith.constant 112 : index
    %c0_8 = arith.constant 0 : index
    %7 = vector.load %arg1[%c112, %c0_8] : memref<128x128xf32, #tpu.memory_space<vmem>>, vector<10x1xf32>
    %c122 = arith.constant 122 : index
    %c0_9 = arith.constant 0 : index
    %8 = vector.load %arg1[%c122, %c0_9] : memref<128x128xf32, #tpu.memory_space<vmem>>, vector<1x1xf32>
    %cst = arith.constant dense<0.000000e+00> : vector<10x128xf32>
    %9 = tpu.matmul %1, %0, %cst {dimension_numbers = #tpu.dot_dimension_numbers<[1], [0], [0], [1], [0, 0, 1, 1], [], []>} : vector<10x5xf32>, vector<5x128xf32>, vector<10x128xf32> -> vector<10x128xf32>
    %10 = vector.broadcast %5 : vector<10x1xf32> to vector<10x128xf32>
    %11 = arith.addf %9, %10 : vector<10x128xf32>
    %cst_10 = arith.constant 0.000000e+00 : f32
    %12 = vector.broadcast %cst_10 : f32 to vector<10x128xf32>
    %13 = arith.maximumf %11, %12 : vector<10x128xf32>
    %cst_11 = arith.constant dense<0.000000e+00> : vector<20x128xf32>
    %14 = tpu.matmul %2, %13, %cst_11 {dimension_numbers = #tpu.dot_dimension_numbers<[1], [0], [0], [1], [0, 0, 1, 1], [], []>} : vector<20x10xf32>, vector<10x128xf32>, vector<20x128xf32> -> vector<20x128xf32>
    %15 = vector.broadcast %6 : vector<20x1xf32> to vector<20x128xf32>
    %16 = arith.addf %14, %15 : vector<20x128xf32>
    %cst_12 = arith.constant 0.000000e+00 : f32
    %17 = vector.broadcast %cst_12 : f32 to vector<20x128xf32>
    %18 = arith.maximumf %16, %17 : vector<20x128xf32>
    %cst_13 = arith.constant dense<0.000000e+00> : vector<10x128xf32>
    %19 = tpu.matmul %3, %18, %cst_13 {dimension_numbers = #tpu.dot_dimension_numbers<[1], [0], [0], [1], [0, 0, 1, 1], [], []>} : vector<10x20xf32>, vector<20x128xf32>, vector<10x128xf32> -> vector<10x128xf32>
    %20 = vector.broadcast %7 : vector<10x1xf32> to vector<10x128xf32>
    %21 = arith.addf %19, %20 : vector<10x128xf32>
    %cst_14 = arith.constant 0.000000e+00 : f32
    %22 = vector.broadcast %cst_14 : f32 to vector<10x128xf32>
    %23 = arith.maximumf %21, %22 : vector<10x128xf32>
    %24 = vector.broadcast %4 : vector<10x1xf32> to vector<10x128xf32>
    %25 = arith.mulf %24, %23 : vector<10x128xf32>
    %cst_15 = arith.constant dense<0.000000e+00> : vector<128xf32>
    %26 = vector.multi_reduction <add>, %25, %cst_15 [0] : vector<10x128xf32> to vector<128xf32>
    %27 = vector.shape_cast %26 : vector<128xf32> to vector<1x128xf32>
    %28 = vector.broadcast %8 : vector<1x1xf32> to vector<1x128xf32>
    %29 = arith.addf %27, %28 : vector<1x128xf32>
    %c0_16 = arith.constant 0 : index
    %c0_17 = arith.constant 0 : index
    %30 = vector.load %arg3[%c0_16, %c0_17] : memref<1x128xf32, #tpu.memory_space<vmem>>, vector<1x128xf32>
    tpu.vector_store %arg3[%c0_16, %c0_17], %29 {strides = array<i32>} : memref<1x128xf32, #tpu.memory_space<vmem>>, vector<1x128xf32>,
    return
  }
  func.func @transform_0(%arg0: i32) -> (i32, i32) {
    %c0_i32 = arith.constant 0 : i32
    %c0_i32_0 = arith.constant 0 : i32
    %c0_i32_1 = arith.constant 0 : i32
    return %c0_i32, %c0_i32_0 : i32, i32
  }
  func.func @transform_1(%arg0: i32) -> (i32, i32) {
    %c0_i32 = arith.constant 0 : i32
    %c0_i32_0 = arith.constant 0 : i32
    return %c0_i32, %arg0 : i32, i32
  }
  func.func @transform_2(%arg0: i32) -> (i32, i32) {
    %c0_i32 = arith.constant 0 : i32
    %c0_i32_0 = arith.constant 0 : i32
    return %c0_i32, %arg0 : i32, i32
  }
}

</mosaic_0001>

<llo_original>
// kernel: mlp_forward.1
$region0: #{mlp_forward.1}
  #allocation0 [shape = 'u32[]', space=smem, size = 0x4, offset = 0x4, fixed_abs, tag = 'smem constant byte address 0x4 - core index']
  #allocation1 [shape = 'u32[72,128]{1,0:T(1,128)}', space=vmem, size = 0x9000, scoped, tag = 'internal scratch']
  %s0 = inlined_call_operand.hbm [shape: f32[128,128], index: 0, kind: input, shape index: {}]
  %s1 = inlined_call_operand.vmem [shape: f32[5,128], index: 1, kind: input, shape index: {}]
  %s2 = inlined_call_operand.vmem [shape: f32[1,128], index: 2, kind: output, shape index: {}]
  %s3 = sld [smem:[#allocation0]]
  $region22: #{mlp_forward.1} parent=0
    _
  %s5 = ssub.s32 1, %s3
  %s6 = scalar_select 0, %s5, %s3
  $region1: #{mlp_forward.1} parent=0
    #allocation2 [shape = 'u8[65536]{0}', space=vmem, size = 0x10000, scoped, tag = 'input window, operand 0, single buffered']
    #allocation3 [shape = 's32[1]{0}', space=sflag, size = 0x4, scoped, tag = 'scoped memory for mlp_forward.1']
    %7 = vsyncpa [#allocation3], 0
    // Predicated region
    $region2: #{mlp_forward.1} parent=1 // pred_check
      _
    $region3: #{mlp_forward.1} parent=1 // pred_check_branch
      %9 = sbr.rel (0) target = $region5
    $region4: #{mlp_forward.1} parent=1 // pred_region
      %11 = vsyncadd [#allocation3], 0
      %s12 = sshll.u32 %s0, 4
      %s13 = int_to_ptr.hbm [resolvable:$true] %s12
      %s14 = sshll.u32 [#allocation2], 4
      %s15 = int_to_ptr.vmem [resolvable:$true] %s14
      %20 = dma.hbm_to_vmem [thread:$0]  %s13, 2048, %s15, [#allocation3], 128, 128, 8
    $region5: #{mlp_forward.1} parent=1 // pred_fallthru
      _
    // Predicated region
    $region6: #{mlp_forward.1} parent=1 // pred_check
      _
    $region7: #{mlp_forward.1} parent=1 // pred_check_branch
      %22 = sbr.rel (0) target = $region9
    $region8: #{mlp_forward.1} parent=1 // pred_region
      _
    $region9: #{mlp_forward.1} parent=1 // pred_fallthru
      _
    // Predicated region
    $region10: #{mlp_forward.1} parent=1 // pred_check
      _
    $region11: #{mlp_forward.1} parent=1 // pred_check_branch
      %24 = sbr.rel (0) target = $region13
    $region12: #{mlp_forward.1} parent=1 // pred_region
      %26 = dma.done [#allocation3], 2048
    $region13: #{mlp_forward.1} parent=1 // pred_fallthru
      _
    %v27 = vld [vmem:[%s1] sm:$0x1f]
    %v28 = vld [vmem:[#allocation2] sm:$0xff]
    %v29 = vld [vmem:[#allocation2 + $0x8] sm:$0x3]
    %v30 = vld [vmem:[#allocation2 + $0x10] sm:$0xff]
    %v31 = vld [vmem:[#allocation2 + $0x18] sm:$0xff]
    %v32 = vld [vmem:[#allocation2 + $0x20] sm:$0xf]
    %v33 = vld [vmem:[#allocation2 + $0x28] sm:$0xff]
    %v34 = vld [vmem:[#allocation2 + $0x30] sm:$0x3]
    %v35 = vld [vmem:[#allocation2 + $0x38] sm:$0xff]
    %v36 = vld [vmem:[#allocation2 + $0x40] sm:$0x3]
    %v37 = vld [vmem:[#allocation2 + $0x48] sm:$0xff]
    %v38 = vld [vmem:[#allocation2 + $0x50] sm:$0x3]
    %v39 = vld [vmem:[#allocation2 + $0x58] sm:$0xff]
    %v40 = vld [vmem:[#allocation2 + $0x60] sm:$0xff]
    %v41 = vld [vmem:[#allocation2 + $0x68] sm:$0xf]
    %v42 = vld [vmem:[#allocation2 + $0x70] sm:$0xff]
    %v43 = vld [vmem:[#allocation2 + $0x78] sm:$0x3]
    %v44 = vld [vmem:[#allocation2 + $0x7a] sm:$0x1]
    %46 = vset.pattern.permute.xlu0 0
    %47 = vperm.xlu0 %46, %v37
    %v48 = vpop.permute.xlu0 %47
    %51 = vset.pattern.permute.xlu0 0
    %52 = vperm.xlu0 %51, %v38
    %v53 = vpop.permute.xlu0 %52
    %vm55 = vcmask 39936
    %v57 = vsel %vm55, %v28, 0
    %v60 = vsel %vm55, %v29, 0
    %vm62 = vcmask 1044480
    %v64 = vsel %vm62, %v27, 0
    %66 = vmatpush.msra.mxu0 0.0
    %67 = vmatpush.msra.mxu0 0.0
    %68 = vmatpush.msra.mxu0 0.0
    %69 = vmatpush.msra.mxu0 0.0
    %70 = vmatpush.msra.mxu0 0.0
    %71 = vmatpush.msra.mxu0 0.0
    %72 = vmatpush.msra.mxu0 0.0
    %73 = vmatpush.msra.mxu0 0.0
    %74 = vmatpush.msra.mxu0 0.0
    %75 = vmatpush.msra.mxu0 0.0
    %76 = vmatpush.msra.mxu0 0.0
    %77 = vmatpush.msra.mxu0 0.0
    %78 = vmatpush.msra.mxu0 0.0
    %79 = vmatpush.msra.mxu0 0.0
    %80 = vmatpush.msra.mxu0 0.0
    %81 = vmatpush.msra.mxu0 %v64
    %82 = vmatmul.f32.gmra.mxu0 %v57
    %v83 = vpop.f32.mrf.mxu0
    %v84 = vadd.f32 %v48, %v83
    %85 = vmatmul.f32.gmra.mxu0 %v60
    %v86 = vpop.f32.mrf.mxu0
    %v87 = vadd.f32 %v53, %v86
    %88 = vdwg.mxu0
    %v89 = vmax.f32 %v84, 0.0
    %v90 = vmax.f32 %v87, 0.0
    %92 = vset.pattern.permute.xlu0 0
    %93 = vperm.xlu0 %92, %v39
    %v94 = vpop.permute.xlu0 %93
    %97 = vset.pattern.permute.xlu0 0
    %98 = vperm.xlu0 %97, %v40
    %v99 = vpop.permute.xlu0 %98
    %102 = vset.pattern.permute.xlu0 0
    %103 = vperm.xlu0 %102, %v41
    %v104 = vpop.permute.xlu0 %103
    %vm106 = vcmask 80896
    %v108 = vsel %vm106, %v30, 0
    %v111 = vsel %vm106, %v31, 0
    %v114 = vsel %vm106, %v32, 0
    %vm116 = vcmask 1041408
    %v118 = vsel %vm116, %v90, 0
    %120 = vmatpush.msra.mxu0 0.0
    %121 = vmatpush.msra.mxu0 0.0
    %122 = vmatpush.msra.mxu0 0.0
    %123 = vmatpush.msra.mxu0 0.0
    %124 = vmatpush.msra.mxu0 0.0
    %125 = vmatpush.msra.mxu0 0.0
    %126 = vmatpush.msra.mxu0 0.0
    %127 = vmatpush.msra.mxu0 0.0
    %128 = vmatpush.msra.mxu0 0.0
    %129 = vmatpush.msra.mxu0 0.0
    %130 = vmatpush.msra.mxu0 0.0
    %131 = vmatpush.msra.mxu0 0.0
    %132 = vmatpush.msra.mxu0 0.0
    %133 = vmatpush.msra.mxu0 0.0
    %134 = vmatpush.msra.mxu0 %v118
    %135 = vmatpush.msra.mxu0 %v89
    %136 = vmatmul.f32.gmra.mxu0 %v108
    %v137 = vpop.f32.mrf.mxu0
    %v138 = vadd.f32 %v94, %v137
    %139 = vmatmul.f32.gmra.mxu0 %v111
    %v140 = vpop.f32.mrf.mxu0
    %v141 = vadd.f32 %v99, %v140
    %142 = vmatmul.f32.gmra.mxu0 %v114
    %v143 = vpop.f32.mrf.mxu0
    %v144 = vadd.f32 %v104, %v143
    %145 = vdwg.mxu0
    %v146 = vmax.f32 %v138, 0.0
    %v147 = vmax.f32 %v141, 0.0
    %v148 = vmax.f32 %v144, 0.0
    %150 = vset.pattern.permute.xlu0 0
    %151 = vperm.xlu0 %150, %v42
    %v152 = vpop.permute.xlu0 %151
    %155 = vset.pattern.permute.xlu0 0
    %156 = vperm.xlu0 %155, %v43
    %v157 = vpop.permute.xlu0 %156
    %vm159 = vcmask 162816
    %v161 = vsel %vm159, %v33, 0
    %v164 = vsel %vm159, %v34, 0
    %vm166 = vcmask 1043456
    %v168 = vsel %vm166, %v148, 0
    %170 = vmatpush.msra.mxu0 0.0
    %171 = vmatpush.msra.mxu0 0.0
    %172 = vmatpush.msra.mxu0 0.0
    %173 = vmatpush.msra.mxu0 0.0
    %174 = vmatpush.msra.mxu0 0.0
    %175 = vmatpush.msra.mxu0 0.0
    %176 = vmatpush.msra.mxu0 0.0
    %177 = vmatpush.msra.mxu0 0.0
    %178 = vmatpush.msra.mxu0 0.0
    %179 = vmatpush.msra.mxu0 0.0
    %180 = vmatpush.msra.mxu0 0.0
    %181 = vmatpush.msra.mxu0 0.0
    %182 = vmatpush.msra.mxu0 0.0
    %183 = vmatpush.msra.mxu0 %v168
    %184 = vmatpush.msra.mxu0 %v147
    %185 = vmatpush.msra.mxu0 %v146
    %186 = vmatmul.f32.gmra.mxu0 %v161
    %v187 = vpop.f32.mrf.mxu0
    %v188 = vadd.f32 %v152, %v187
    %189 = vmatmul.f32.gmra.mxu0 %v164
    %v190 = vpop.f32.mrf.mxu0
    %v191 = vadd.f32 %v157, %v190
    %192 = vdwg.mxu0
    %v193 = vmax.f32 %v188, 0.0
    %v194 = vmax.f32 %v191, 0.0
    %196 = vset.pattern.permute.xlu0 0
    %197 = vperm.xlu0 %196, %v35
    %v198 = vpop.permute.xlu0 %197
    %201 = vset.pattern.permute.xlu0 0
    %202 = vperm.xlu0 %201, %v36
    %v203 = vpop.permute.xlu0 %202
    %v205 = vmul.f32 %v198, %v193
    %v206 = vmul.f32 %v203, %v194
    %v207 = vsel %vm116, %v206, 0.0
    %v208 = vadd.f32 %v205, %v207
    %v209 = vrot.slane %v208, 4
    %v210 = vadd.f32 %v208, %v209
    %v211 = vrot.slane %v210, 2
    %v212 = vadd.f32 %v210, %v211
    %v213 = vrot.slane %v212, 1
    %v214 = vadd.f32 %v212, %v213
    %216 = vset.pattern.permute.xlu0 0
    %217 = vperm.xlu0 %216, %v44
    %v218 = vpop.permute.xlu0 %217
    %v220 = vadd.f32 %v214, %v218
    %221 = vst [vmem:[%s2] sm:$0x1] %v220
    // Predicated region
    $region14: #{mlp_forward.1} parent=1 // pred_check
      _
    $region15: #{mlp_forward.1} parent=1 // pred_check_branch
      %223 = sbr.rel (0) target = $region17
    $region16: #{mlp_forward.1} parent=1 // pred_region
      _
    $region17: #{mlp_forward.1} parent=1 // pred_fallthru
      _
    // Predicated region
    $region18: #{mlp_forward.1} parent=1 // pred_check
      _
    $region19: #{mlp_forward.1} parent=1 // pred_check_branch
      %225 = sbr.rel (0) target = $region21
    $region20: #{mlp_forward.1} parent=1 // pred_region
      _
    $region21: #{mlp_forward.1} parent=1 // pred_fallthru
      _
    %226 = vsyncpa [#allocation3], 1

</llo_original>
